<compile_context>
chip_gen: v7x
topology: tpu7x:2x2x1
jax: 0.10.0
libtpu: 0.0.40
codegen_flags: <defaults>
</compile_context>

<pallas_src>
import math

import jax
import jax.numpy as jnp
from jax.experimental import pallas as pl
from jax.experimental.pallas import tpu as pltpu

_MIB = 1024 * 1024


def _gwl_kernel(x_ref, w_ref, b_ref, o_ref):
    # x_ref: (TB, C, D)  slab of batch rows
    # w_ref: (1,  C, D)  shared weights (grid-invariant -> stays resident)
    # b_ref: (1,  C)     shared bias    (grid-invariant -> stays resident)
    # o_ref: (TB, C)     output block
    x = x_ref[...]
    w = w_ref[...]
    # Multiply in the native dtype (bf16 VALU on v6e/v7x), accumulate in f32.
    s = jnp.sum(x * w, axis=-1, dtype=jnp.float32)                # (TB, C)
    o_ref[...] = (s + b_ref[...].astype(jnp.float32)).astype(o_ref.dtype)


def _round_up(n, m):
    return ((n + m - 1) // m) * m


def _tpu_memory_plan():
    """Return (vmem_data_budget, vmem_limit_cap, num_tensorcores) for this chip."""
    vmem_cap = 64 * _MIB          # conservative default (v7x per-TensorCore)
    cores = 2
    try:
        info = pltpu.get_tpu_info()
        cap = getattr(info, "vmem_capacity_bytes", None)
        if cap:
            vmem_cap = int(cap)
        c = (getattr(info, "num_tensorcores", None)
             or getattr(info, "tensorcores_per_chip", None)
             or getattr(info, "num_cores", None))
        cores = int(c) if c else (2 if vmem_cap <= 80 * _MIB else 1)
    except Exception:
        pass
    if vmem_cap >= 100 * _MIB:
        # v5e / v6e: 128 MiB VMEM, single TensorCore per chip.
        return 96 * _MIB, 110 * _MIB, cores
    # v7x-class: 64 MiB VMEM per TensorCore, 2 TensorCores per chip.
    return 46 * _MIB, 52 * _MIB, cores


def group_wise_linear(x, W, b=None):
    """x: (B, C, D), W: (1, C, D), b: (1, C) or None -> (B, C)."""
    B, C, D = x.shape
    assert W.shape == (1, C, D)
    if b is None:                      # bias=False in the PyTorch module
        b = jnp.zeros((1, C), dtype=x.dtype)
    assert b.shape == (1, C)
    out_dtype = x.dtype

    x_item = x.dtype.itemsize
    w_item = W.dtype.itemsize
    b_item = b.dtype.itemsize
    o_item = jnp.dtype(out_dtype).itemsize

    vmem_data_budget, vmem_limit_cap, num_cores = _tpu_memory_plan()

    # Grid-invariant W / b still get (conservative) double buffers; charge them.
    fixed_bytes = 2 * (C * D * w_item + C * b_item)
    # Per batch row: x slab + output block, each double-buffered by the pipeline.
    per_row_bytes = 2 * (C * D * x_item + C * o_item)

    avail = max(0, vmem_data_budget - fixed_bytes)
    rows_in_budget = avail // per_row_bytes

    # Fewest grid steps that respect the VMEM budget.
    steps = 1 if rows_in_budget >= B else pl.cdiv(B, max(rows_in_budget, 1))
    # Only 2-TensorCore parts (v7x) benefit from a forced split of the
    # "parallel" batch axis; give each core >= 2 steps when there is enough work.
    if num_cores >= 2 and B >= 4 * 8:
        steps = max(steps, 4)

    if steps <= 1 or B <= 8:
        # Single slab: block dims equal the full array dims -> always legal.
        tb = B
    else:
        # When tb != B it must be a multiple of 8 (output block sublane dim).
        tb = min(_round_up(pl.cdiv(B, steps), 8), _round_up(B, 8))
    grid = (pl.cdiv(B, tb),)
    # TODO(synk): if a single 8-row slab still exceeds the budget (huge C*D),
    # add a second "arbitrary" grid axis over D with an f32 accumulator scratch.

    needed_vmem = fixed_bytes + tb * per_row_bytes
    vmem_limit = int(min(vmem_limit_cap, max(needed_vmem + 4 * _MIB, 16 * _MIB)))

    cost = pl.CostEstimate(
        flops=2 * B * C * D,
        transcendentals=0,
        bytes_accessed=(B * C * D * x_item      # x read once
                        + C * D * w_item        # W read once (resident)
                        + C * b_item            # bias read once
                        + B * C * o_item),      # output written once
    )

    return pl.pallas_call(
        _gwl_kernel,
        out_shape=jax.ShapeDtypeStruct((B, C), out_dtype),
        grid_spec=pltpu.PrefetchScalarGridSpec(
            num_scalar_prefetch=0,
            grid=grid,
            in_specs=[
                # x: TB-row slab; last two block dims == full (C, D) extents,
                # so no host-side lane padding is needed (Mosaic pads in VMEM).
                pl.BlockSpec((tb, C, D), lambda i: (i, 0, 0)),
                pl.BlockSpec((1, C, D), lambda i: (0, 0, 0)),   # W: resident
                pl.BlockSpec((1, C), lambda i: (0, 0)),         # b: resident
            ],
            out_specs=pl.BlockSpec((tb, C), lambda i: (i, 0)),
        ),
        compiler_params=pltpu.CompilerParams(
            dimension_semantics=("parallel",),
            vmem_limit_bytes=vmem_limit,
        ),
        cost_estimate=cost,
    )(x, W, b)


def init_params(key, num_class, hidden_dim, dtype=jnp.float32):
    """Deterministic re-implementation of reset_parameters (uniform +-1/sqrt(D))."""
    stdv = 1.0 / math.sqrt(hidden_dim)
    kw, kb = jax.random.split(key)
    W = jax.random.uniform(kw, (1, num_class, hidden_dim), dtype=dtype,
                           minval=-stdv, maxval=stdv)
    b = jax.random.uniform(kb, (1, num_class), dtype=dtype,
                           minval=-stdv, maxval=stdv)
    return W, b


if __name__ == "__main__":
    B, num_class, hidden_dim = 2, 8, 32

    key = jax.random.PRNGKey(0)
    kx, kp = jax.random.split(key)
    x = jax.random.normal(kx, (B, num_class, hidden_dim), dtype=jnp.float32)
    W, b = init_params(kp, num_class, hidden_dim)

    out = jax.block_until_ready(group_wise_linear(x, W, b))

    # Pure-JAX reference check
    ref = jnp.sum(W * x, axis=-1) + b
    assert out.shape == (B, num_class)
    assert jnp.allclose(out, ref, atol=1e-5, rtol=1e-5), "mismatch vs reference"

    print("KERNEL_OK")
</pallas_src>

<mosaic_0001>
module attributes {stable_mosaic.version = 11 : i64} {
  func.func @_gwl_kernel(%arg0: i32, %arg1: memref<2x8x32xf32, #tpu.memory_space<vmem>>, %arg2: memref<1x8x32xf32, #tpu.memory_space<vmem>>, %arg3: memref<1x8xf32, #tpu.memory_space<vmem>>, %arg4: memref<2x8xf32, #tpu.memory_space<vmem>>) attributes {dimension_semantics = [#tpu.dimension_semantics<parallel>], iteration_bounds = array<i64: 1>, scalar_prefetch = 0 : i64, scratch_operands = 0 : i64, tpu.core_type = #tpu.core_type<tc>, window_params = [{transform_indices = @transform_0, window_bounds = array<i64: 2, 8, 32>}, {pipeline_mode = #tpu.pipeline_mode<synchronous>, transform_indices = @transform_1, window_bounds = array<i64: 1, 8, 32>}, {pipeline_mode = #tpu.pipeline_mode<synchronous>, transform_indices = @transform_2, window_bounds = array<i64: 1, 8>}, {transform_indices = @transform_3, window_bounds = array<i64: 2, 8>}]} {
    %c0 = arith.constant 0 : index
    %c0_0 = arith.constant 0 : index
    %c0_1 = arith.constant 0 : index
    %0 = vector.load %arg1[%c0, %c0_0, %c0_1] : memref<2x8x32xf32, #tpu.memory_space<vmem>>, vector<2x8x32xf32>
    %c0_2 = arith.constant 0 : index
    %c0_3 = arith.constant 0 : index
    %c0_4 = arith.constant 0 : index
    %1 = vector.load %arg2[%c0_2, %c0_3, %c0_4] : memref<1x8x32xf32, #tpu.memory_space<vmem>>, vector<1x8x32xf32>
    %2 = vector.broadcast %1 : vector<1x8x32xf32> to vector<2x8x32xf32>
    %3 = arith.mulf %0, %2 : vector<2x8x32xf32>
    %cst = arith.constant dense<0.000000e+00> : vector<2x8xf32>
    %4 = vector.multi_reduction <add>, %3, %cst [2] : vector<2x8x32xf32> to vector<2x8xf32>
    %c0_5 = arith.constant 0 : index
    %c0_6 = arith.constant 0 : index
    %5 = vector.load %arg3[%c0_5, %c0_6] : memref<1x8xf32, #tpu.memory_space<vmem>>, vector<1x8xf32>
    %6 = vector.broadcast %5 : vector<1x8xf32> to vector<2x8xf32>
    %7 = arith.addf %4, %6 : vector<2x8xf32>
    %c0_7 = arith.constant 0 : index
    %c0_8 = arith.constant 0 : index
    %8 = vector.load %arg4[%c0_7, %c0_8] : memref<2x8xf32, #tpu.memory_space<vmem>>, vector<2x8xf32>
    tpu.vector_store %arg4[%c0_7, %c0_8], %7 {strides = array<i32>} : memref<2x8xf32, #tpu.memory_space<vmem>>, vector<2x8xf32>,
    return
  }
  func.func @transform_0(%arg0: i32) -> (i32, i32, i32) {
    %c0_i32 = arith.constant 0 : i32
    %c0_i32_0 = arith.constant 0 : i32
    %c0_i32_1 = arith.constant 0 : i32
    return %arg0, %c0_i32, %c0_i32_0 : i32, i32, i32
  }
  func.func @transform_1(%arg0: i32) -> (i32, i32, i32) {
    %c0_i32 = arith.constant 0 : i32
    %c0_i32_0 = arith.constant 0 : i32
    %c0_i32_1 = arith.constant 0 : i32
    %c0_i32_2 = arith.constant 0 : i32
    return %c0_i32, %c0_i32_0, %c0_i32_1 : i32, i32, i32
  }
  func.func @transform_2(%arg0: i32) -> (i32, i32) {
    %c0_i32 = arith.constant 0 : i32
    %c0_i32_0 = arith.constant 0 : i32
    %c0_i32_1 = arith.constant 0 : i32
    return %c0_i32, %c0_i32_0 : i32, i32
  }
  func.func @transform_3(%arg0: i32) -> (i32, i32) {
    %c0_i32 = arith.constant 0 : i32
    %c0_i32_0 = arith.constant 0 : i32
    return %arg0, %c0_i32 : i32, i32
  }
}

</mosaic_0001>

<llo_original>
// kernel: tpu_custom_call.1
$region0: #{tpu_custom_call.1}
  #allocation0 [shape = 'u32[]', space=smem, size = 0x4, offset = 0x4, fixed_abs, tag = 'smem constant byte address 0x4 - core index']
  #allocation1 [shape = 'u32[144,128]{1,0:T(1,128)}', space=vmem, size = 0x12000, scoped, tag = 'internal scratch']
  %s0 = inlined_call_operand.hbm [shape: f32[2,8,32], index: 0, kind: input, shape index: {}]
  %s1 = inlined_call_operand.hbm [shape: f32[1,8,32], index: 1, kind: input, shape index: {}]
  %s2 = inlined_call_operand.vmem [shape: f32[1,8], index: 2, kind: input, shape index: {}]
  %s3 = inlined_call_operand.hbm [shape: f32[2,8], index: 3, kind: output, shape index: {}]
  %s4 = sld [smem:[#allocation0]]
  $region30: #{tpu_custom_call.1} parent=0
    _
  %s6 = ssub.s32 1, %s4
  %s7 = scalar_select 0, %s6, %s4
  $region1: #{tpu_custom_call.1} parent=0
    #allocation2 [shape = 'u8[8192]{0}', space=vmem, size = 0x2000, scoped, tag = 'input window, operand 0, single buffered']
    #allocation3 [shape = 's32[1]{0}', space=sflag, size = 0x4, scoped, tag = 'scoped memory for tpu_custom_call.1']
    #allocation4 [shape = 's32[1]{0}', space=sflag, size = 0x4, scoped, tag = 'scoped memory for tpu_custom_call.1']
    #allocation5 [shape = 'u8[4096]{0}', space=vmem, size = 0x1000, scoped, tag = 'input window, operand 1, single buffered']
    #allocation6 [shape = 's32[1]{0}', space=sflag, size = 0x4, scoped, tag = 'scoped memory for tpu_custom_call.1']
    #allocation7 [shape = 'u8[1024]{0}', space=vmem, size = 0x400, scoped, tag = 'output window, operand 0, single buffered']
    %8 = vsyncpa [#allocation3], 0
    %9 = vsyncpa [#allocation6], 0
    %10 = vsyncpa [#allocation4], 0
    // Predicated region
    $region2: #{tpu_custom_call.1} parent=1 // pred_check
      _
    $region3: #{tpu_custom_call.1} parent=1 // pred_check_branch
      %12 = sbr.rel (0) target = $region5
    $region4: #{tpu_custom_call.1} parent=1 // pred_region
      %s14 = ssub.s32 256, 256
      %15 = vsyncadd [#allocation3], %s14
      %s16 = sshll.u32 [#allocation2], 4
      %s17 = int_to_ptr.vmem [resolvable:$true] %s16
      %22 = dma.hbm_to_vmem [thread:$0]  %s0, 256, %s17, [#allocation3], 128, 128, 8
    $region5: #{tpu_custom_call.1} parent=1 // pred_fallthru
      _
    // Predicated region
    $region6: #{tpu_custom_call.1} parent=1 // pred_check
      _
    $region7: #{tpu_custom_call.1} parent=1 // pred_check_branch
      %24 = sbr.rel (0) target = $region9
    $region8: #{tpu_custom_call.1} parent=1 // pred_region
      %s26 = ssub.s32 128, 128
      %27 = vsyncadd [#allocation6], %s26
      %s29 = sshll.u32 [#allocation5], 4
      %s30 = int_to_ptr.vmem [resolvable:$true] %s29
      %32 = dma.hbm_to_vmem [thread:$0]  %s1, 128, %s30, [#allocation6]
    $region9: #{tpu_custom_call.1} parent=1 // pred_fallthru
      _
    // Predicated region
    $region10: #{tpu_custom_call.1} parent=1 // pred_check
      _
    $region11: #{tpu_custom_call.1} parent=1 // pred_check_branch
      %34 = sbr.rel (0) target = $region13
    $region12: #{tpu_custom_call.1} parent=1 // pred_region
      _
    $region13: #{tpu_custom_call.1} parent=1 // pred_fallthru
      _
    // Predicated region
    $region14: #{tpu_custom_call.1} parent=1 // pred_check
      _
    $region15: #{tpu_custom_call.1} parent=1 // pred_check_branch
      %36 = sbr.rel (0) target = $region17
    $region16: #{tpu_custom_call.1} parent=1 // pred_region
      %37 = dma.done [#allocation3], 256
    $region17: #{tpu_custom_call.1} parent=1 // pred_fallthru
      _
    // Predicated region
    $region18: #{tpu_custom_call.1} parent=1 // pred_check
      _
    $region19: #{tpu_custom_call.1} parent=1 // pred_check_branch
      %39 = sbr.rel (0) target = $region21
    $region20: #{tpu_custom_call.1} parent=1 // pred_region
      %40 = dma.done [#allocation6], 128
    $region21: #{tpu_custom_call.1} parent=1 // pred_fallthru
      _
    %v41 = vld [vmem:[#allocation2] sm:$0xff]
    %v42 = vld [vmem:[#allocation2 + $0x8] sm:$0xff]
    %v43 = vld [vmem:[#allocation5] sm:$0xff]
    %v44 = vmul.f32 %v41, %v43
    %v45 = vmul.f32 %v42, %v43
    %vm46 = vcmask 261120
    %v47 = vsel %vm46, %v44, 0.0
    %48 = vadd.xlane.f32.xlu0 %v47
    %v49 = vpop.xlane.xlu0 %48
    %v50 = vsel %vm46, %v45, 0.0
    %51 = vadd.xlane.f32.xlu0 %v50
    %v52 = vpop.xlane.xlu0 %51
    %v53 = vld [vmem:[%s2] sm:$0x1]
    %v55 = vlaneseq
    %v56 = vshrl.u32 %v55, 7
    %v57 = vsub.s32 0, %v56
    %v58 = vrot.slane %v53, %v57
    %60 = vbcast.lane.b32.xlu0 %v58, 256
    %v61 = vpop.permute.xlu0 %60
    %v63 = vadd.f32 %v49, %v61
    %v64 = vadd.f32 %v52, %v61
    %67 = vset.pattern.permute.xlu0 0
    %68 = vperm.xlu0 %67, %v63
    %v69 = vpop.permute.xlu0 %68
    %70 = vset.pattern.permute.xlu0 0
    %71 = vperm.xlu0 %70, %v64
    %v72 = vpop.permute.xlu0 %71
    %v73 = vlaneseq
    %v74 = vand.u32 %v73, 127
    %v75 = vlaneseq
    %v76 = vshrl.u32 %v75, 7
    %v77 = vsub.s32 %v74, %v76
    %v78 = vrot.slane %v69, %v77
    %v79 = vlaneseq
    %v80 = vshrl.u32 %v79, 7
    %v81 = vsub.s32 %v74, %v80
    %v82 = vrot.slane %v72, %v81
    %vm83 = vcmask 1041409
    %v84 = vsel %vm83, %v82, %v78
    %vm86 = vcmask 58368
    %87 = vst.msk [vmem:[#allocation7] sm:$0x3] %vm86, %v84
    // Predicated region
    $region22: #{tpu_custom_call.1} parent=1 // pred_check
      _
    $region23: #{tpu_custom_call.1} parent=1 // pred_check_branch
      %89 = sbr.rel (0) target = $region25
    $region24: #{tpu_custom_call.1} parent=1 // pred_region
      %s91 = ssub.s32 32, 32
      %92 = vsyncadd [#allocation4], %s91
      %s94 = sshll.u32 [#allocation7], 4
      %s95 = int_to_ptr.vmem [resolvable:$true] %s94
      %97 = dma.vmem_to_hbm [thread:$0]  %s95, 32, %s3, [#allocation4]
    $region25: #{tpu_custom_call.1} parent=1 // pred_fallthru
      _
    // Predicated region
    $region26: #{tpu_custom_call.1} parent=1 // pred_check
      _
    $region27: #{tpu_custom_call.1} parent=1 // pred_check_branch
      %99 = sbr.rel (0) target = $region29
    $region28: #{tpu_custom_call.1} parent=1 // pred_region
      %100 = dma.done [#allocation4], 32
    $region29: #{tpu_custom_call.1} parent=1 // pred_fallthru
      _
    %101 = vsyncpa [#allocation3], 1
    %102 = vsyncpa [#allocation6], 1
    %103 = vsyncpa [#allocation4], 1

</llo_original>
